<compile_context>
chip_gen: v6e
topology: v6e:2x2x1
jax: 0.10.0
libtpu: 0.0.40
codegen_flags: <defaults>
</compile_context>

<pallas_src>
import functools
import math

import jax
import jax.numpy as jnp
from jax import lax
from jax.experimental import pallas as pl
from jax.experimental.pallas import tpu as pltpu


_SQRT_HALF = 0.7071067811865476  # 1/sqrt(2)
_VMEM_LIMIT = 32 * 1024 * 1024   # fits v5e/v6e (128 MiB) and v7x (64 MiB) with headroom


def _gelu(y, approximate):
    if approximate:
        # tanh path -> EUP slot (effectively free next to the MXU)
        return jax.nn.gelu(y, approximate=True)
    # exact erf GELU (matches PyTorch default)
    return 0.5 * y * (1.0 + lax.erf(y * _SQRT_HALF))


def _round_up(x, m):
    return ((x + m - 1) // m) * m


def _pick_tiles(batch, in_features, out_features):
    tm = min(256, _round_up(batch, 8))
    tn = min(512, _round_up(out_features, 128))
    tk = min(512, _round_up(in_features, 128))
    return tm, tn, tk


def _pad2d(a, rows, cols):
    r, c = a.shape
    if r == rows and c == cols:
        return a
    return jnp.pad(a, ((0, rows - r), (0, cols - c)))


# ----------------------------------------------------------------------------
# Kernel 1: tiled Linear + GELU (no labels)
# ----------------------------------------------------------------------------
def _linear_gelu_kernel(x_ref, w_ref, b_ref, o_ref, acc_ref, *, approximate):
    k = pl.program_id(2)

    @pl.when(k == 0)
    def _():
        acc_ref[...] = jnp.zeros_like(acc_ref)

    acc_ref[...] += jnp.dot(x_ref[...], w_ref[...],
                            preferred_element_type=jnp.float32)

    @pl.when(k == pl.num_programs(2) - 1)
    def _():
        y = acc_ref[...] + b_ref[...].astype(jnp.float32)
        o_ref[...] = _gelu(y, approximate).astype(o_ref.dtype)


def linear_gelu(x, w_t, b, *, approximate=False):
    """x: (B, IN), w_t: (IN, OUT), b: (OUT,) -> gelu(x @ w_t + b): (B, OUT) f32."""
    B, IN = x.shape
    OUT = w_t.shape[1]
    TM, TN, TK = _pick_tiles(B, IN, OUT)
    Bp, Kp, Np = _round_up(B, TM), _round_up(IN, TK), _round_up(OUT, TN)

    xp = _pad2d(x, Bp, Kp)
    wp = _pad2d(w_t, Kp, Np)
    bp = _pad2d(b.reshape(1, OUT).astype(jnp.float32), 1, Np)

    grid = (Bp // TM, Np // TN, Kp // TK)
    kernel = functools.partial(_linear_gelu_kernel, approximate=approximate)
    out = pl.pallas_call(
        kernel,
        out_shape=jax.ShapeDtypeStruct((Bp, Np), jnp.float32),
        grid_spec=pltpu.PrefetchScalarGridSpec(
            num_scalar_prefetch=0,
            grid=grid,
            in_specs=[
                pl.BlockSpec((TM, TK), lambda i, j, k: (i, k)),
                pl.BlockSpec((TK, TN), lambda i, j, k: (k, j)),
                pl.BlockSpec((1, TN), lambda i, j, k: (0, j)),
            ],
            out_specs=pl.BlockSpec((TM, TN), lambda i, j, k: (i, j)),
            scratch_shapes=[pltpu.VMEM((TM, TN), jnp.float32)],
        ),
        compiler_params=pltpu.CompilerParams(
            dimension_semantics=("parallel", "parallel", "arbitrary"),
            vmem_limit_bytes=_VMEM_LIMIT,
        ),
        cost_estimate=pl.CostEstimate(
            flops=2 * Bp * Kp * Np,
            transcendentals=Bp * Np,
            bytes_accessed=4 * (Bp * Kp + Kp * Np + Bp * Np),
        ),
    )(xp, wp, bp)
    return out[:B, :OUT]


# ----------------------------------------------------------------------------
# Kernel 2: fused Linear + GELU + cross-entropy partial sums (labels path)
# ----------------------------------------------------------------------------
def _linear_gelu_ce_kernel(x_ref, w_ref, b_ref, lab_ref, o_ref, psum_ref,
                           acc_ref, *, batch, num_classes, tm, approximate):
    i = pl.program_id(0)
    k = pl.program_id(1)

    @pl.when(k == 0)
    def _():
        acc_ref[...] = jnp.zeros_like(acc_ref)

    acc_ref[...] += jnp.dot(x_ref[...], w_ref[...],
                            preferred_element_type=jnp.float32)

    @pl.when(k == pl.num_programs(1) - 1)
    def _():
        y = acc_ref[...] + b_ref[...].astype(jnp.float32)
        g = _gelu(y, approximate)                          # (TM, Cp) f32
        o_ref[...] = g.astype(o_ref.dtype)

        tm_, cpad = g.shape
        cls = lax.broadcasted_iota(jnp.int32, (tm_, cpad), 1)
        col_valid = cls < num_classes
        # masked log-sum-exp over the valid class columns
        g_masked = jnp.where(col_valid, g, jnp.float32(-1e30))
        m = jnp.max(g_masked, axis=-1, keepdims=True)
        sumexp = jnp.sum(jnp.where(col_valid, jnp.exp(g - m), 0.0),
                         axis=-1, keepdims=True)
        lse = m + jnp.log(sumexp)
        onehot = (cls == lab_ref[...]).astype(jnp.float32)
        picked = jnp.sum(onehot * g, axis=-1, keepdims=True)
        # mask out padded batch rows
        row = i * tm + lax.broadcasted_iota(jnp.int32, (tm_, 1), 0)
        per_row = jnp.where(row < batch, lse - picked, 0.0)
        partial = jnp.sum(per_row)
        psum_ref[...] = jnp.broadcast_to(partial, psum_ref.shape).astype(
            psum_ref.dtype)


def linear_gelu_ce(x, w_t, b, labels, *, approximate=False):
    """Fused gelu(fc1(x)) + mean CrossEntropy(gelu(fc1(x)), labels)."""
    B, IN = x.shape
    OUT = w_t.shape[1]
    TM, _, TK = _pick_tiles(B, IN, OUT)
    Cp = _round_up(OUT, 128)   # classes kept resident (lane-dense, un-tiled)
    Bp, Kp = _round_up(B, TM), _round_up(IN, TK)
    # TODO(synk): if OUT grows very large (> ~8k classes), tile the class axis
    # with an online-logsumexp instead of keeping the full padded row resident.

    xp = _pad2d(x, Bp, Kp)
    wp = _pad2d(w_t, Kp, Cp)
    bp = _pad2d(b.reshape(1, OUT).astype(jnp.float32), 1, Cp)
    lab = jnp.zeros((Bp, 1), jnp.int32).at[:B, 0].set(labels.astype(jnp.int32))

    nb = Bp // TM
    grid = (nb, Kp // TK)
    kernel = functools.partial(
        _linear_gelu_ce_kernel, batch=B, num_classes=OUT, tm=TM,
        approximate=approximate)
    act, psum = pl.pallas_call(
        kernel,
        out_shape=(
            jax.ShapeDtypeStruct((Bp, Cp), jnp.float32),
            jax.ShapeDtypeStruct((nb, 128), jnp.float32),
        ),
        grid_spec=pltpu.PrefetchScalarGridSpec(
            num_scalar_prefetch=0,
            grid=grid,
            in_specs=[
                pl.BlockSpec((TM, TK), lambda i, k: (i, k)),
                pl.BlockSpec((TK, Cp), lambda i, k: (k, 0)),
                pl.BlockSpec((1, Cp), lambda i, k: (0, 0)),
                pl.BlockSpec((TM, 1), lambda i, k: (i, 0)),
            ],
            out_specs=(
                pl.BlockSpec((TM, Cp), lambda i, k: (i, 0)),
                pl.BlockSpec((1, 128), lambda i, k: (i, 0)),
            ),
            scratch_shapes=[pltpu.VMEM((TM, Cp), jnp.float32)],
        ),
        compiler_params=pltpu.CompilerParams(
            dimension_semantics=("parallel", "arbitrary"),
            vmem_limit_bytes=_VMEM_LIMIT,
        ),
        cost_estimate=pl.CostEstimate(
            flops=2 * Bp * Kp * Cp,
            transcendentals=2 * Bp * Cp,
            bytes_accessed=4 * (Bp * Kp + Kp * Cp + Bp * Cp),
        ),
    )(xp, wp, bp, lab)
    loss = jnp.sum(psum[:, 0]) / jnp.float32(B)
    return loss, act[:B, :OUT]


# ----------------------------------------------------------------------------
# StackingNNet forward
# ----------------------------------------------------------------------------
class StackingNNetPallas:
    def __init__(self, input_size, output_size, key, approx_gelu=False):
        # nn.Linear-style init: uniform(-1/sqrt(in), +1/sqrt(in)).
        k_w, k_b = jax.random.split(key)
        bound = 1.0 / math.sqrt(input_size)
        w = jax.random.uniform(k_w, (output_size, input_size),
                               jnp.float32, -bound, bound)   # PyTorch (out, in)
        b = jax.random.uniform(k_b, (output_size,),
                               jnp.float32, -bound, bound)
        self.w_t = jnp.asarray(w.T)          # (in, out) so the kernel does x @ W^T
        self.b = b
        self.approx_gelu = approx_gelu

    def __call__(self, x, labels=None):
        if labels is None:
            act = linear_gelu(x, self.w_t, self.b, approximate=self.approx_gelu)
            return (act,)
        loss, act = linear_gelu_ce(x, self.w_t, self.b, labels,
                                   approximate=self.approx_gelu)
        return (loss, act)


# ----------------------------------------------------------------------------
# Pure-JAX reference (for runtime sanity check)
# ----------------------------------------------------------------------------
def _ref_forward(x, w_t, b, labels=None):
    y = x @ w_t + b
    g = 0.5 * y * (1.0 + lax.erf(y * _SQRT_HALF))
    if labels is None:
        return (g,)
    m = jnp.max(g, axis=-1, keepdims=True)
    lse = m + jnp.log(jnp.sum(jnp.exp(g - m), axis=-1, keepdims=True))
    picked = jnp.take_along_axis(g, labels[:, None].astype(jnp.int32), axis=-1)
    loss = jnp.mean(lse - picked)
    return (loss, g)


if __name__ == "__main__":
    key = jax.random.PRNGKey(0)

    # --- small case (matches the module's toy sizes) ---
    B, IN, OUT = 8, 32, 16
    k_model, k_x, k_y, k2_x, k2_y, k2_m = jax.random.split(key, 6)
    model = StackingNNetPallas(IN, OUT, k_model)
    x = jax.random.normal(k_x, (B, IN), jnp.float32)
    labels = jax.random.randint(k_y, (B,), 0, OUT, jnp.int32)

    (act,) = model(x)                       # forward without labels
    loss, act2 = model(x, labels)           # forward with labels
    jax.block_until_ready((act, loss, act2))

    ref_act, = _ref_forward(x, model.w_t, model.b)
    ref_loss, _ = _ref_forward(x, model.w_t, model.b, labels)
    assert act.shape == (B, OUT) and act2.shape == (B, OUT) and loss.shape == ()
    assert jnp.allclose(act, ref_act, atol=1e-3, rtol=1e-3)
    assert jnp.allclose(act2, ref_act, atol=1e-3, rtol=1e-3)
    assert jnp.allclose(loss, ref_loss, atol=1e-3, rtol=1e-3)

    # --- slightly larger case: exercises multi-tile batch, K accumulation,
    #     and batch/class padding masks ---
    B2, IN2, OUT2 = 300, 600, 40
    model2 = StackingNNetPallas(IN2, OUT2, k2_m)
    x2 = jax.random.normal(k2_x, (B2, IN2), jnp.float32)
    labels2 = jax.random.randint(k2_y, (B2,), 0, OUT2, jnp.int32)
    loss2, act2b = model2(x2, labels2)
    jax.block_until_ready((loss2, act2b))
    ref_loss2, ref_act2 = _ref_forward(x2, model2.w_t, model2.b, labels2)
    assert jnp.allclose(act2b, ref_act2, atol=2e-3, rtol=2e-3)
    assert jnp.allclose(loss2, ref_loss2, atol=2e-3, rtol=2e-3)

    print("KERNEL_OK")
</pallas_src>

<mosaic_0001>
module attributes {stable_mosaic.version = 11 : i64} {
  func.func @_linear_gelu_kernel(%arg0: i32, %arg1: i32, %arg2: i32, %arg3: memref<8x128xf32, #tpu.memory_space<vmem>>, %arg4: memref<128x128xf32, #tpu.memory_space<vmem>>, %arg5: memref<1x128xf32, #tpu.memory_space<vmem>>, %arg6: memref<8x128xf32, #tpu.memory_space<vmem>>, %arg7: memref<8x128xf32, #tpu.memory_space<vmem>>) attributes {dimension_semantics = [#tpu.dimension_semantics<parallel>, #tpu.dimension_semantics<parallel>, #tpu.dimension_semantics<arbitrary>], iteration_bounds = array<i64: 1, 1, 1>, scalar_prefetch = 0 : i64, scratch_operands = 1 : i64, tpu.core_type = #tpu.core_type<tc>, window_params = [{transform_indices = @transform_0, window_bounds = array<i64: 8, 128>}, {transform_indices = @transform_1, window_bounds = array<i64: 128, 128>}, {transform_indices = @transform_2, window_bounds = array<i64: 1, 128>}, {transform_indices = @transform_3, window_bounds = array<i64: 8, 128>}]} {
    %c0_i32 = arith.constant 0 : i32
    %0 = arith.cmpi eq, %arg2, %c0_i32 : i32
    %1 = arith.extui %0 : i1 to i32
    %c0_i32_0 = arith.constant 0 : i32
    %2 = arith.cmpi ne, %1, %c0_i32_0 : i32
    scf.if %2 {
      %cst_10 = arith.constant 0.000000e+00 : f32
      %12 = vector.broadcast %cst_10 : f32 to vector<8x128xf32>
      %c0_11 = arith.constant 0 : index
      %c0_12 = arith.constant 0 : index
      %13 = vector.load %arg7[%c0_11, %c0_12] : memref<8x128xf32, #tpu.memory_space<vmem>>, vector<8x128xf32>
      tpu.vector_store %arg7[%c0_11, %c0_12], %12 {strides = array<i32>} : memref<8x128xf32, #tpu.memory_space<vmem>>, vector<8x128xf32>,
    } else {
    }
    %c0 = arith.constant 0 : index
    %c0_1 = arith.constant 0 : index
    %3 = vector.load %arg7[%c0, %c0_1] : memref<8x128xf32, #tpu.memory_space<vmem>>, vector<8x128xf32>
    %c0_2 = arith.constant 0 : index
    %c0_3 = arith.constant 0 : index
    %4 = vector.load %arg3[%c0_2, %c0_3] : memref<8x128xf32, #tpu.memory_space<vmem>>, vector<8x128xf32>
    %c0_4 = arith.constant 0 : index
    %c0_5 = arith.constant 0 : index
    %5 = vector.load %arg4[%c0_4, %c0_5] : memref<128x128xf32, #tpu.memory_space<vmem>>, vector<128x128xf32>
    %cst = arith.constant dense<0.000000e+00> : vector<8x128xf32>
    %6 = tpu.matmul %4, %5, %cst {dimension_numbers = #tpu.dot_dimension_numbers<[1], [0], [0], [1], [0, 0, 1, 1], [], []>} : vector<8x128xf32>, vector<128x128xf32>, vector<8x128xf32> -> vector<8x128xf32>
    %7 = arith.addf %3, %6 : vector<8x128xf32>
    %c0_6 = arith.constant 0 : index
    %c0_7 = arith.constant 0 : index
    %8 = vector.load %arg7[%c0_6, %c0_7] : memref<8x128xf32, #tpu.memory_space<vmem>>, vector<8x128xf32>
    tpu.vector_store %arg7[%c0_6, %c0_7], %7 {strides = array<i32>} : memref<8x128xf32, #tpu.memory_space<vmem>>, vector<8x128xf32>,
    %c0_i32_8 = arith.constant 0 : i32
    %9 = arith.cmpi eq, %arg2, %c0_i32_8 : i32
    %10 = arith.extui %9 : i1 to i32
    %c0_i32_9 = arith.constant 0 : i32
    %11 = arith.cmpi ne, %10, %c0_i32_9 : i32
    scf.if %11 {
      %c0_10 = arith.constant 0 : index
      %c0_11 = arith.constant 0 : index
      %12 = vector.load %arg7[%c0_10, %c0_11] : memref<8x128xf32, #tpu.memory_space<vmem>>, vector<8x128xf32>
      %c0_12 = arith.constant 0 : index
      %c0_13 = arith.constant 0 : index
      %13 = vector.load %arg5[%c0_12, %c0_13] : memref<1x128xf32, #tpu.memory_space<vmem>>, vector<1x128xf32>
      %14 = vector.broadcast %13 : vector<1x128xf32> to vector<8x128xf32>
      %15 = arith.addf %12, %14 : vector<8x128xf32>
      %cst_14 = arith.constant 5.000000e-01 : f32
      %16 = vector.broadcast %cst_14 : f32 to vector<8x128xf32>
      %17 = arith.mulf %16, %15 : vector<8x128xf32>
      %cst_15 = arith.constant 0.707106769 : f32
      %18 = vector.broadcast %cst_15 : f32 to vector<8x128xf32>
      %19 = arith.mulf %15, %18 : vector<8x128xf32>
      %20 = math.erf %19 : vector<8x128xf32>
      %cst_16 = arith.constant 1.000000e+00 : f32
      %21 = vector.broadcast %cst_16 : f32 to vector<8x128xf32>
      %22 = arith.addf %21, %20 : vector<8x128xf32>
      %23 = arith.mulf %17, %22 : vector<8x128xf32>
      %c0_17 = arith.constant 0 : index
      %c0_18 = arith.constant 0 : index
      %24 = vector.load %arg6[%c0_17, %c0_18] : memref<8x128xf32, #tpu.memory_space<vmem>>, vector<8x128xf32>
      tpu.vector_store %arg6[%c0_17, %c0_18], %23 {strides = array<i32>} : memref<8x128xf32, #tpu.memory_space<vmem>>, vector<8x128xf32>,
    } else {
    }
    return
  }
  func.func @transform_0(%arg0: i32, %arg1: i32, %arg2: i32) -> (i32, i32) {
    %c0_i32 = arith.constant 0 : i32
    return %arg0, %arg2 : i32, i32
  }
  func.func @transform_1(%arg0: i32, %arg1: i32, %arg2: i32) -> (i32, i32) {
    %c0_i32 = arith.constant 0 : i32
    return %arg2, %arg1 : i32, i32
  }
  func.func @transform_2(%arg0: i32, %arg1: i32, %arg2: i32) -> (i32, i32) {
    %c0_i32 = arith.constant 0 : i32
    %c0_i32_0 = arith.constant 0 : i32
    return %c0_i32, %arg1 : i32, i32
  }
  func.func @transform_3(%arg0: i32, %arg1: i32, %arg2: i32) -> (i32, i32) {
    %c0_i32 = arith.constant 0 : i32
    return %arg0, %arg1 : i32, i32
  }
}

</mosaic_0001>

<llo_original>
// kernel: tpu_custom_call.1
$region0: #{tpu_custom_call.1}
  #allocation0 [shape = 'u32[]', space=smem, size = 0x4, offset = 0x4, fixed_abs, tag = 'smem constant byte address 0x4 - core index']
  #allocation1 [shape = 'u32[144,128]{1,0:T(1,128)}', space=vmem, size = 0x12000, scoped, tag = 'internal scratch']
  #allocation2 [shape = 'f32[8,128]{1,0:T(8,128)}', space=vmem, size = 0x1000, scoped, tag = 'scratch operand']
  %s0 = inlined_call_operand.hbm [shape: f32[8,128], index: 0, kind: input, shape index: {}]
  %s1 = inlined_call_operand.hbm [shape: f32[128,128], index: 1, kind: input, shape index: {}]
  %s2 = inlined_call_operand.vmem [shape: f32[1,128], index: 2, kind: input, shape index: {}]
  %s3 = inlined_call_operand.hbm [shape: f32[8,128], index: 3, kind: output, shape index: {}]
  %s4 = sld [smem:[#allocation0]]
  $region38: #{tpu_custom_call.1} parent=0
    _
  %s6 = ssub.s32 1, %s4
  %s7 = scalar_select 0, %s6, %s4
  $region1: #{tpu_custom_call.1} parent=0
    #allocation3 [shape = 'u8[4096]{0}', space=vmem, size = 0x1000, scoped, tag = 'input window, operand 0, single buffered']
    #allocation4 [shape = 's32[1]{0}', space=sflag, size = 0x4, scoped, tag = 'scoped memory for tpu_custom_call.1']
    #allocation5 [shape = 's32[1]{0}', space=sflag, size = 0x4, scoped, tag = 'scoped memory for tpu_custom_call.1']
    #allocation6 [shape = 'u8[65536]{0}', space=vmem, size = 0x10000, scoped, tag = 'input window, operand 1, single buffered']
    #allocation7 [shape = 's32[1]{0}', space=sflag, size = 0x4, scoped, tag = 'scoped memory for tpu_custom_call.1']
    #allocation8 [shape = 'u8[4096]{0}', space=vmem, size = 0x1000, scoped, tag = 'output window, operand 0, single buffered']
    %8 = vsyncpa [#allocation4], 0
    %9 = vsyncpa [#allocation7], 0
    %10 = vsyncpa [#allocation5], 0
    // Predicated region
    $region2: #{tpu_custom_call.1} parent=1 // pred_check
      _
    $region3: #{tpu_custom_call.1} parent=1 // pred_check_branch
      %12 = sbr.rel (0) target = $region5
    $region4: #{tpu_custom_call.1} parent=1 // pred_region
      %s14 = ssub.s32 128, 128
      %15 = vsyncadd [#allocation4], %s14
      %s17 = sshll.u32 [#allocation3], 4
      %s18 = int_to_ptr.vmem [resolvable:$true] %s17
      %20 = dma.hbm_to_vmem [thread:$0]  %s0, 128, %s18, [#allocation4]
    $region5: #{tpu_custom_call.1} parent=1 // pred_fallthru
      _
    // Predicated region
    $region6: #{tpu_custom_call.1} parent=1 // pred_check
      _
    $region7: #{tpu_custom_call.1} parent=1 // pred_check_branch
      %22 = sbr.rel (0) target = $region9
    $region8: #{tpu_custom_call.1} parent=1 // pred_region
      %s24 = ssub.s32 2048, 2048
      %25 = vsyncadd [#allocation7], %s24
      %s26 = sshll.u32 [#allocation6], 4
      %s27 = int_to_ptr.vmem [resolvable:$true] %s26
      %32 = dma.hbm_to_vmem [thread:$0]  %s1, 2048, %s27, [#allocation7], 128, 128, 8
    $region9: #{tpu_custom_call.1} parent=1 // pred_fallthru
      _
    // Predicated region
    $region10: #{tpu_custom_call.1} parent=1 // pred_check
      _
    $region11: #{tpu_custom_call.1} parent=1 // pred_check_branch
      %34 = sbr.rel (0) target = $region13
    $region12: #{tpu_custom_call.1} parent=1 // pred_region
      _
    $region13: #{tpu_custom_call.1} parent=1 // pred_fallthru
      _
    // Predicated region
    $region14: #{tpu_custom_call.1} parent=1 // pred_check
      _
    $region15: #{tpu_custom_call.1} parent=1 // pred_check_branch
      %36 = sbr.rel (0) target = $region17
    $region16: #{tpu_custom_call.1} parent=1 // pred_region
      %37 = dma.done [#allocation4], 128
    $region17: #{tpu_custom_call.1} parent=1 // pred_fallthru
      _
    // Predicated region
    $region18: #{tpu_custom_call.1} parent=1 // pred_check
      _
    $region19: #{tpu_custom_call.1} parent=1 // pred_check_branch
      %39 = sbr.rel (0) target = $region21
    $region20: #{tpu_custom_call.1} parent=1 // pred_region
      %40 = dma.done [#allocation7], 2048
    $region21: #{tpu_custom_call.1} parent=1 // pred_fallthru
      _
    %p41 = scmp.eq.s32.totalorder 0, 0
    // Predicated region
    $region22: #{tpu_custom_call.1} parent=1 // pred_check
      %p42 = pneg %p41
    $region23: #{tpu_custom_call.1} parent=1 // pred_check_branch
      %44 = sbr.rel (%p42) target = $region25
    $region24: #{tpu_custom_call.1} parent=1 // pred_region
      %45 = vst [vmem:[#allocation2] sm:$0xff] 0.0
    $region25: #{tpu_custom_call.1} parent=1 // pred_fallthru
      _
    %v46 = vld [vmem:[#allocation2] sm:$0xff]
    %v47 = vld [vmem:[#allocation3] sm:$0xff]
    %v48 = vld [vmem:[#allocation6] sm:$0xff]
    %v49 = vld [vmem:[#allocation6 + $0x8] sm:$0xff]
    %v50 = vld [vmem:[#allocation6 + $0x10] sm:$0xff]
    %v51 = vld [vmem:[#allocation6 + $0x18] sm:$0xff]
    %v52 = vld [vmem:[#allocation6 + $0x20] sm:$0xff]
    %v53 = vld [vmem:[#allocation6 + $0x28] sm:$0xff]
    %v54 = vld [vmem:[#allocation6 + $0x30] sm:$0xff]
    %v55 = vld [vmem:[#allocation6 + $0x38] sm:$0xff]
    %v56 = vld [vmem:[#allocation6 + $0x40] sm:$0xff]
    %v57 = vld [vmem:[#allocation6 + $0x48] sm:$0xff]
    %v58 = vld [vmem:[#allocation6 + $0x50] sm:$0xff]
    %v59 = vld [vmem:[#allocation6 + $0x58] sm:$0xff]
    %v60 = vld [vmem:[#allocation6 + $0x60] sm:$0xff]
    %v61 = vld [vmem:[#allocation6 + $0x68] sm:$0xff]
    %v62 = vld [vmem:[#allocation6 + $0x70] sm:$0xff]
    %v63 = vld [vmem:[#allocation6 + $0x78] sm:$0xff]
    %64 = vmatprep.subr.mxu0 0.0
    %65 = vmatpush1.msra.mxu0 %v63
    %66 = vmatprep.subr.mxu0 0.0
    %67 = vmatpush1.msra.mxu0 %v62
    %68 = vmatprep.subr.mxu0 0.0
    %69 = vmatpush1.msra.mxu0 %v61
    %70 = vmatprep.subr.mxu0 0.0
    %71 = vmatpush1.msra.mxu0 %v60
    %72 = vmatprep.subr.mxu0 0.0
    %73 = vmatpush1.msra.mxu0 %v59
    %74 = vmatprep.subr.mxu0 0.0
    %75 = vmatpush1.msra.mxu0 %v58
    %76 = vmatprep.subr.mxu0 0.0
    %77 = vmatpush1.msra.mxu0 %v57
    %78 = vmatprep.subr.mxu0 0.0
    %79 = vmatpush1.msra.mxu0 %v56
    %80 = vmatprep.subr.mxu0 0.0
    %81 = vmatpush1.msra.mxu0 %v55
    %82 = vmatprep.subr.mxu0 0.0
    %83 = vmatpush1.msra.mxu0 %v54
    %84 = vmatprep.subr.mxu0 0.0
    %85 = vmatpush1.msra.mxu0 %v53
    %86 = vmatprep.subr.mxu0 0.0
    %87 = vmatpush1.msra.mxu0 %v52
    %88 = vmatprep.subr.mxu0 0.0
    %89 = vmatpush1.msra.mxu0 %v51
    %90 = vmatprep.subr.mxu0 0.0
    %91 = vmatpush1.msra.mxu0 %v50
    %92 = vmatprep.subr.mxu0 0.0
    %93 = vmatpush1.msra.mxu0 %v49
    %94 = vmatprep.subr.mxu0 0.0
    %95 = vmatpush1.msra.mxu0 %v48
    %96 = vmatprep.subr.mxu0 0.0
    %97 = vmatpush2.msra.mxu0 0.0
    %98 = vmatprep.subr.mxu0 0.0
    %99 = vmatpush2.msra.mxu0 0.0
    %100 = vmatprep.subr.mxu0 0.0
    %101 = vmatpush2.msra.mxu0 0.0
    %102 = vmatprep.subr.mxu0 0.0
    %103 = vmatpush2.msra.mxu0 0.0
    %104 = vmatprep.subr.mxu0 0.0
    %105 = vmatpush2.msra.mxu0 0.0
    %106 = vmatprep.subr.mxu0 0.0
    %107 = vmatpush2.msra.mxu0 0.0
    %108 = vmatprep.subr.mxu0 0.0
    %109 = vmatpush2.msra.mxu0 0.0
    %110 = vmatprep.subr.mxu0 0.0
    %111 = vmatpush2.msra.mxu0 0.0
    %112 = vmatprep.subr.mxu0 0.0
    %113 = vmatpush2.msra.mxu0 0.0
    %114 = vmatprep.subr.mxu0 0.0
    %115 = vmatpush2.msra.mxu0 0.0
    %116 = vmatprep.subr.mxu0 0.0
    %117 = vmatpush2.msra.mxu0 0.0
    %118 = vmatprep.subr.mxu0 0.0
    %119 = vmatpush2.msra.mxu0 0.0
    %120 = vmatprep.subr.mxu0 0.0
    %121 = vmatpush2.msra.mxu0 0.0
    %122 = vmatprep.subr.mxu0 0.0
    %123 = vmatpush2.msra.mxu0 0.0
    %124 = vmatprep.subr.mxu0 0.0
    %125 = vmatpush2.msra.mxu0 0.0
    %126 = vmatprep.subr.mxu0 0.0
    %127 = vmatpush2.msra.mxu0 0.0
    %128 = vmatprep.mubr.f32.mxu0 0.0
    %129 = vmatmul.mubr.f32.gmra.mxu0 %v47
    %v130 = vpop.f32.mrf.mxu0
    %v131 = vadd.f32 0.0, %v130
    %v132 = vpop.f32.mrf.mxu0
    %133 = vdwg.mxu0
    %v134 = vadd.f32 %v46, %v131
    %135 = vst [vmem:[#allocation2] sm:$0xff] %v134
    // Predicated region
    $region26: #{tpu_custom_call.1} parent=1 // pred_check
      %p136 = pneg %p41
    $region27: #{tpu_custom_call.1} parent=1 // pred_check_branch
      %138 = sbr.rel (%p136) target = $region29
    $region28: #{tpu_custom_call.1} parent=1 // pred_region
      %v139 = vld [vmem:[#allocation2] sm:$0xff]
      %v140 = vld [vmem:[%s2] sm:$0x1]
      %v142 = vlaneseq
      %v143 = vshrl.u32 %v142, 7
      %v144 = vsub.s32 0, %v143
      %v145 = vrot.slane %v140, %v144
      %v147 = vadd.f32 %v139, %v145
      %v148 = vmul.f32 %v147, 0.5
      %v149 = vmul.f32 %v147, 0.70710677
      %v150 = verf.f32.pop %v149
      %v151 = vadd.f32 %v150, 1.0
      %v152 = vmul.f32 %v148, %v151
      %153 = vst [vmem:[#allocation8] sm:$0xff] %v152
    $region29: #{tpu_custom_call.1} parent=1 // pred_fallthru
      _
    // Predicated region
    $region30: #{tpu_custom_call.1} parent=1 // pred_check
      _
    $region31: #{tpu_custom_call.1} parent=1 // pred_check_branch
      %155 = sbr.rel (0) target = $region33
    $region32: #{tpu_custom_call.1} parent=1 // pred_region
      %s157 = ssub.s32 128, 128
      %158 = vsyncadd [#allocation5], %s157
      %s160 = sshll.u32 [#allocation8], 4
      %s161 = int_to_ptr.vmem [resolvable:$true] %s160
      %163 = dma.vmem_to_hbm [thread:$0]  %s161, 128, %s3, [#allocation5]
    $region33: #{tpu_custom_call.1} parent=1 // pred_fallthru
      _
    // Predicated region
    $region34: #{tpu_custom_call.1} parent=1 // pred_check
      _
    $region35: #{tpu_custom_call.1} parent=1 // pred_check_branch
      %165 = sbr.rel (0) target = $region37
    $region36: #{tpu_custom_call.1} parent=1 // pred_region
      %166 = dma.done [#allocation5], 128
    $region37: #{tpu_custom_call.1} parent=1 // pred_fallthru
      _
    %167 = vsyncpa [#allocation4], 1
    %168 = vsyncpa [#allocation7], 1
    %169 = vsyncpa [#allocation5], 1

</llo_original>
